<compile_context>
chip_gen: v7x
topology: tpu7x:2x2x1
jax: 0.10.0
libtpu: 0.0.40
codegen_flags: <defaults>
</compile_context>

<pallas_src>
import math

import jax
import jax.numpy as jnp
import numpy as np
from jax.experimental import pallas as pl
from jax.experimental.pallas import tpu as pltpu


# ----------------------------------------------------------------------------
# Kernel: fused fc1 (K-tiled) -> tanh-GELU -> fc2 -> output-side token_drop
# ----------------------------------------------------------------------------
def _caption_embedder_kernel(drop_ref,   # VMEM (TM, 1)  int32 per-row drop flag
                             cap_ref,    # VMEM (TM, TK) caption rows (storage dtype)
                             yout_ref,   # VMEM (TM, H)  tiled Mlp(y_embedding) rows
                             w1_ref,     # VMEM (TK, H)  fc1 weight chunk (compute dtype)
                             b1_ref,     # VMEM (1, H)   fc1 bias (f32)
                             w2_ref,     # VMEM (H, H)   fc2 weight (compute dtype)
                             b2_ref,     # VMEM (1, H)   fc2 bias (f32)
                             out_ref,    # VMEM (TM, H)
                             acc_ref):   # VMEM (TM, H)  f32 fc1 accumulator
    k = pl.program_id(1)

    @pl.when(k == 0)
    def _init():
        acc_ref[...] = jnp.zeros_like(acc_ref)

    # fc1 partial product for this K chunk.  Cast the caption tile from its
    # storage dtype to the weight dtype here (VPU-cheap, hidden under the MXU)
    # so the wrapper never runs a separate astype pass over B*T*C in HBM.
    x = cap_ref[...].astype(w1_ref.dtype)
    acc_ref[...] += jnp.dot(x, w1_ref[...], preferred_element_type=jnp.float32)

    @pl.when(k == pl.num_programs(1) - 1)
    def _finalize():
        h = acc_ref[...] + b1_ref[...]                       # f32
        # GELU with tanh approximation (matches nn.GELU(approximate='tanh')).
        c0 = math.sqrt(2.0 / math.pi)
        g = 0.5 * h * (1.0 + jnp.tanh(c0 * (h + 0.044715 * h * h * h)))
        # fc2 (+bias), f32 accumulation on the MXU.
        o = jnp.dot(g.astype(w2_ref.dtype), w2_ref[...],
                    preferred_element_type=jnp.float32)
        o = (o + b2_ref[...]).astype(out_ref.dtype)
        # token_drop as an H-wide output select: dropped batches take the
        # precomputed Mlp(y_embedding) rows.
        out_ref[...] = jnp.where(drop_ref[...] != 0, yout_ref[...], o)


# ----------------------------------------------------------------------------
# Tiling / capacity helpers
# ----------------------------------------------------------------------------
def _vmem_capacity_bytes():
    """Real per-TensorCore VMEM capacity (64 MiB on v7x, 128 MiB v5e/v6e)."""
    try:
        info = pltpu.get_tpu_info()
        for name in ("vmem_capacity_bytes", "vmem_size_bytes", "vmem_bytes"):
            cap = getattr(info, name, None)
            if cap:
                return int(cap)
    except Exception:
        pass
    try:
        kind = jax.devices()[0].device_kind.lower()
    except Exception:
        kind = ""
    return (64 << 20) if "v7" in kind else (128 << 20)


def _pick_row_tile(B, T, target_rows=256, max_rows=2048):
    """Pick TM = g*T (whole batches per tile so the tiled Mlp(y_embedding)
    rows stay aligned with token positions), g | B, TM % 8 == 0.

    target_rows=256 fills the 256-wide MXU on v6e/v7x; on v5e the 128x128 MXU
    just takes more M passes, which costs nothing (MXU-bound) and the larger
    tile amortizes per-step overhead / DMA.
    """
    M = B * T
    valid = [g for g in range(1, B + 1) if B % g == 0 and (g * T) % 8 == 0]
    under = [g for g in valid if g * T <= target_rows]
    if under:
        return max(under) * T
    capped = [g for g in valid if g * T <= max_rows]
    if capped:
        return min(capped) * T
    if M <= max_rows:
        return M            # full-extent block is always layout-legal
    # TODO(synk): pad token_num to a multiple of 8 (and mask) for shapes that
    # cannot be tiled; refusing is safer than silently blowing the VMEM budget.
    raise ValueError(
        f"CaptionEmbedder Pallas kernel: cannot pick a row tile <= {max_rows} "
        f"rows for B={B}, T={T}; pad token_num to a multiple of 8.")


def _pick_k_tile(C, target_k=512):
    """K-chunk of the fc1 reduction.  Must be a multiple of 128 (lane
    constraint on the caption block) or the full C, and must divide C."""
    if C <= target_k:
        return C
    cands = [k for k in range(128, target_k + 1, 128) if C % k == 0]
    return max(cands) if cands else C


def _mlp_rows_xla(x, w1, b1, w2, b2, compute_dtype):
    """Tiny (T, C) -> (T, H) MLP, used only for the unconditional y_embedding
    branch (token_drop is applied on the output side in the kernel)."""
    h = jnp.dot(x.astype(compute_dtype), w1.astype(compute_dtype),
                preferred_element_type=jnp.float32,
                precision=jax.lax.Precision.HIGHEST)
    h = h + b1.astype(jnp.float32)
    c0 = math.sqrt(2.0 / math.pi)
    g = 0.5 * h * (1.0 + jnp.tanh(c0 * (h + 0.044715 * h * h * h)))
    o = jnp.dot(g.astype(compute_dtype), w2.astype(compute_dtype),
                preferred_element_type=jnp.float32,
                precision=jax.lax.Precision.HIGHEST)
    return o + b2.astype(jnp.float32)


# ----------------------------------------------------------------------------
# Wrapper
# ----------------------------------------------------------------------------
def caption_embedder_forward(caption, y_embedding, w1, b1, w2, b2, drop_ids,
                             *, compute_dtype=jnp.bfloat16, out_dtype=None,
                             target_rows=256, target_k=512):
    """caption: (B, 1, T, C); drop_ids: (B,) int32 (1 = use y_embedding)."""
    B, one, T, C = caption.shape
    assert one == 1
    H = w1.shape[1]
    compute_dtype = jnp.dtype(compute_dtype)
    out_dtype = compute_dtype if out_dtype is None else jnp.dtype(out_dtype)

    M = B * T
    TM = _pick_row_tile(B, T, target_rows)
    TK = _pick_k_tile(C, target_k)
    grid = (M // TM, C // TK)
    bpt = TM // T                                  # whole batches per row tile

    # Flatten B*T into the matmul M dimension; keep the storage dtype (the
    # cast to compute_dtype happens on the tile inside the kernel).
    cap2d = caption.reshape(M, C)
    # Per-row drop flag (row r belongs to batch r // T).
    drop_rows = jnp.repeat(drop_ids.astype(jnp.int32), T).reshape(M, 1)
    # Unconditional branch computed once and tiled to one row tile.
    y_out = _mlp_rows_xla(y_embedding, w1, b1, w2, b2, compute_dtype)
    yout_tile = jnp.tile(y_out, (bpt, 1)).astype(out_dtype)

    w1c = w1.astype(compute_dtype)
    w2c = w2.astype(compute_dtype)
    b1f = b1.reshape(1, H).astype(jnp.float32)
    b2f = b2.reshape(1, H).astype(jnp.float32)

    # Explicit VMEM budget, capped at the device's real capacity minus a few
    # MiB of compiler headroom.  All blocks double-buffered by the default
    # pipeline (constant-index blocks are DMA'd only once regardless).
    cap_item = jnp.dtype(caption.dtype).itemsize
    cd_item = compute_dtype.itemsize
    out_item = out_dtype.itemsize
    moving = 2 * (TM * 4 + TM * TK * cap_item + TK * H * cd_item
                  + TM * H * out_item)
    resident = 2 * (TM * H * out_item + H * H * cd_item + 2 * H * 4)
    scratch = TM * H * 4
    interm = TM * TK * cd_item + 2 * TM * H * 4
    need = moving + resident + scratch + interm
    vmem_limit = int(min(max(1.25 * need + (2 << 20), 32 << 20),
                         _vmem_capacity_bytes() - (4 << 20)))

    grid_spec = pltpu.PrefetchScalarGridSpec(
        num_scalar_prefetch=0,
        grid=grid,
        in_specs=[
            pl.BlockSpec((TM, 1), lambda m, k: (m, 0)),    # per-row drop flag
            pl.BlockSpec((TM, TK), lambda m, k: (m, k)),   # caption rows
            pl.BlockSpec((TM, H), lambda m, k: (0, 0)),    # tiled Mlp(y_embedding)
            pl.BlockSpec((TK, H), lambda m, k: (k, 0)),    # w1 chunk (streams over C)
            pl.BlockSpec((1, H), lambda m, k: (0, 0)),     # b1 (f32)
            pl.BlockSpec((H, H), lambda m, k: (0, 0)),     # w2
            pl.BlockSpec((1, H), lambda m, k: (0, 0)),     # b2 (f32)
        ],
        # NOTE: at the tiny demo H (<128) the output stores are masked
        # (vst.msk); at production H=1152 the out tile is lane-dense.
        out_specs=pl.BlockSpec((TM, H), lambda m, k: (m, 0)),
        scratch_shapes=[pltpu.VMEM((TM, H), jnp.float32)],
    )

    out = pl.pallas_call(
        _caption_embedder_kernel,
        out_shape=jax.ShapeDtypeStruct((M, H), out_dtype),
        grid_spec=grid_spec,
        compiler_params=pltpu.CompilerParams(
            dimension_semantics=("parallel", "arbitrary"),
            vmem_limit_bytes=vmem_limit),
    )(drop_rows, cap2d, yout_tile, w1c, b1f, w2c, b2f)

    return out.reshape(B, 1, T, H)


def caption_embedder(caption, params, *, train, uncond_prob,
                     force_drop_ids=None, rng_key=None,
                     compute_dtype=jnp.bfloat16, out_dtype=None):
    """Glue matching CaptionEmbedder.forward.  Drop-id sampling (torch.rand in
    the original) is done with jax.random here, outside the kernel."""
    y_embedding, w1, b1, w2, b2 = params
    B = caption.shape[0]
    if train:
        assert caption.shape[2:] == y_embedding.shape

    use_dropout = uncond_prob > 0
    if (train and use_dropout) or (force_drop_ids is not None):
        if force_drop_ids is None:
            assert rng_key is not None
            drop_ids = (jax.random.uniform(rng_key, (B,)) < uncond_prob)
            drop_ids = drop_ids.astype(jnp.int32)
        else:
            drop_ids = (force_drop_ids == 1).astype(jnp.int32)
    else:
        drop_ids = jnp.zeros((B,), dtype=jnp.int32)

    return caption_embedder_forward(caption, y_embedding, w1, b1, w2, b2,
                                    drop_ids, compute_dtype=compute_dtype,
                                    out_dtype=out_dtype)


# ----------------------------------------------------------------------------
# Pure-JAX reference (for a sanity check)
# ----------------------------------------------------------------------------
def _reference(caption, params, drop_ids):
    y_embedding, w1, b1, w2, b2 = params
    x = jnp.where(drop_ids[:, None, None, None] == 1, y_embedding, caption)
    h = jnp.einsum('bstc,ch->bsth', x, w1,
                   precision=jax.lax.Precision.HIGHEST) + b1
    c0 = math.sqrt(2.0 / math.pi)
    g = 0.5 * h * (1.0 + jnp.tanh(c0 * (h + 0.044715 * h ** 3)))
    return jnp.einsum('bsth,hk->bstk', g, w2,
                      precision=jax.lax.Precision.HIGHEST) + b2


# ----------------------------------------------------------------------------
# Main
# ----------------------------------------------------------------------------
if __name__ == "__main__":
    key = jax.random.PRNGKey(0)
    k_cap, k_yemb, k_w1, k_b1, k_w2, k_b2 = jax.random.split(key, 6)

    # Small shapes consistent with the module (token_num, in_channels, hidden).
    B = 2            # batch
    T = 8            # token_num
    C = 32           # in_channels
    H = 32           # hidden_size
    uncond_prob = 0.5

    caption = jax.random.normal(k_cap, (B, 1, T, C), dtype=jnp.float32)
    y_embedding = jax.random.normal(k_yemb, (T, C), dtype=jnp.float32) / math.sqrt(C)
    w1 = jax.random.normal(k_w1, (C, H), dtype=jnp.float32) * 0.02
    b1 = jax.random.normal(k_b1, (H,), dtype=jnp.float32) * 0.02
    w2 = jax.random.normal(k_w2, (H, H), dtype=jnp.float32) * 0.02
    b2 = jax.random.normal(k_b2, (H,), dtype=jnp.float32) * 0.02
    params = (y_embedding, w1, b1, w2, b2)

    # Deterministic classifier-free-guidance drop mask (train=True path).
    force_drop_ids = jnp.array([1, 0], dtype=jnp.int32)
    ref = _reference(caption, params, force_drop_ids)

    # f32 compute path: must match the reference tightly.
    out_f32 = caption_embedder(caption, params, train=True,
                               uncond_prob=uncond_prob,
                               force_drop_ids=force_drop_ids,
                               compute_dtype=jnp.float32)
    out_f32 = jax.block_until_ready(out_f32)
    assert out_f32.shape == (B, 1, T, H)
    np.testing.assert_allclose(np.asarray(out_f32), np.asarray(ref),
                               rtol=1e-4, atol=1e-5)

    # Default bf16 MXU path (production recommendation): f32 accumulation
    # keeps it close to the f32 reference at bf16-level tolerance.
    out_bf16 = caption_embedder(caption, params, train=True,
                                uncond_prob=uncond_prob,
                                force_drop_ids=force_drop_ids)
    out_bf16 = jax.block_until_ready(out_bf16)
    np.testing.assert_allclose(np.asarray(out_bf16.astype(jnp.float32)),
                               np.asarray(ref), rtol=5e-2, atol=5e-2)

    print("KERNEL_OK")
</pallas_src>

<mosaic_0001>
module attributes {stable_mosaic.version = 11 : i64} {
  func.func @_caption_embedder_kernel(%arg0: i32, %arg1: i32, %arg2: memref<16x1xi32, #tpu.memory_space<vmem>>, %arg3: memref<16x32xf32, #tpu.memory_space<vmem>>, %arg4: memref<16x32xf32, #tpu.memory_space<vmem>>, %arg5: memref<32x32xf32, #tpu.memory_space<vmem>>, %arg6: memref<1x32xf32, #tpu.memory_space<vmem>>, %arg7: memref<32x32xf32, #tpu.memory_space<vmem>>, %arg8: memref<1x32xf32, #tpu.memory_space<vmem>>, %arg9: memref<16x32xf32, #tpu.memory_space<vmem>>, %arg10: memref<16x32xf32, #tpu.memory_space<vmem>>) attributes {dimension_semantics = [#tpu.dimension_semantics<parallel>, #tpu.dimension_semantics<arbitrary>], iteration_bounds = array<i64: 1, 1>, scalar_prefetch = 0 : i64, scratch_operands = 1 : i64, tpu.core_type = #tpu.core_type<tc>, window_params = [{transform_indices = @transform_0, window_bounds = array<i64: 16, 1>}, {transform_indices = @transform_1, window_bounds = array<i64: 16, 32>}, {pipeline_mode = #tpu.pipeline_mode<synchronous>, transform_indices = @transform_2, window_bounds = array<i64: 16, 32>}, {transform_indices = @transform_3, window_bounds = array<i64: 32, 32>}, {pipeline_mode = #tpu.pipeline_mode<synchronous>, transform_indices = @transform_4, window_bounds = array<i64: 1, 32>}, {pipeline_mode = #tpu.pipeline_mode<synchronous>, transform_indices = @transform_5, window_bounds = array<i64: 32, 32>}, {pipeline_mode = #tpu.pipeline_mode<synchronous>, transform_indices = @transform_6, window_bounds = array<i64: 1, 32>}, {transform_indices = @transform_7, window_bounds = array<i64: 16, 32>}]} {
    %c0_i32 = arith.constant 0 : i32
    %0 = arith.cmpi eq, %arg1, %c0_i32 : i32
    %1 = arith.extui %0 : i1 to i32
    %c0_i32_0 = arith.constant 0 : i32
    %2 = arith.cmpi ne, %1, %c0_i32_0 : i32
    scf.if %2 {
      %cst_10 = arith.constant 0.000000e+00 : f32
      %12 = vector.broadcast %cst_10 : f32 to vector<16x32xf32>
      %c0_11 = arith.constant 0 : index
      %c0_12 = arith.constant 0 : index
      %13 = vector.load %arg10[%c0_11, %c0_12] : memref<16x32xf32, #tpu.memory_space<vmem>>, vector<16x32xf32>
      tpu.vector_store %arg10[%c0_11, %c0_12], %12 {strides = array<i32>} : memref<16x32xf32, #tpu.memory_space<vmem>>, vector<16x32xf32>,
    } else {
    }
    %c0 = arith.constant 0 : index
    %c0_1 = arith.constant 0 : index
    %3 = vector.load %arg3[%c0, %c0_1] : memref<16x32xf32, #tpu.memory_space<vmem>>, vector<16x32xf32>
    %c0_2 = arith.constant 0 : index
    %c0_3 = arith.constant 0 : index
    %4 = vector.load %arg10[%c0_2, %c0_3] : memref<16x32xf32, #tpu.memory_space<vmem>>, vector<16x32xf32>
    %c0_4 = arith.constant 0 : index
    %c0_5 = arith.constant 0 : index
    %5 = vector.load %arg5[%c0_4, %c0_5] : memref<32x32xf32, #tpu.memory_space<vmem>>, vector<32x32xf32>
    %cst = arith.constant dense<0.000000e+00> : vector<16x32xf32>
    %6 = tpu.matmul %3, %5, %cst {dimension_numbers = #tpu.dot_dimension_numbers<[1], [0], [0], [1], [0, 0, 1, 1], [], []>} : vector<16x32xf32>, vector<32x32xf32>, vector<16x32xf32> -> vector<16x32xf32>
    %7 = arith.addf %4, %6 : vector<16x32xf32>
    %c0_6 = arith.constant 0 : index
    %c0_7 = arith.constant 0 : index
    %8 = vector.load %arg10[%c0_6, %c0_7] : memref<16x32xf32, #tpu.memory_space<vmem>>, vector<16x32xf32>
    tpu.vector_store %arg10[%c0_6, %c0_7], %7 {strides = array<i32>} : memref<16x32xf32, #tpu.memory_space<vmem>>, vector<16x32xf32>,
    %c0_i32_8 = arith.constant 0 : i32
    %9 = arith.cmpi eq, %arg1, %c0_i32_8 : i32
    %10 = arith.extui %9 : i1 to i32
    %c0_i32_9 = arith.constant 0 : i32
    %11 = arith.cmpi ne, %10, %c0_i32_9 : i32
    scf.if %11 {
      %c0_10 = arith.constant 0 : index
      %c0_11 = arith.constant 0 : index
      %12 = vector.load %arg10[%c0_10, %c0_11] : memref<16x32xf32, #tpu.memory_space<vmem>>, vector<16x32xf32>
      %c0_12 = arith.constant 0 : index
      %c0_13 = arith.constant 0 : index
      %13 = vector.load %arg6[%c0_12, %c0_13] : memref<1x32xf32, #tpu.memory_space<vmem>>, vector<1x32xf32>
      %14 = vector.broadcast %13 : vector<1x32xf32> to vector<16x32xf32>
      %15 = arith.addf %12, %14 : vector<16x32xf32>
      %cst_14 = arith.constant 5.000000e-01 : f32
      %16 = vector.broadcast %cst_14 : f32 to vector<16x32xf32>
      %17 = arith.mulf %16, %15 : vector<16x32xf32>
      %cst_15 = arith.constant 4.471500e-02 : f32
      %18 = vector.broadcast %cst_15 : f32 to vector<16x32xf32>
      %19 = arith.mulf %18, %15 : vector<16x32xf32>
      %20 = arith.mulf %19, %15 : vector<16x32xf32>
      %21 = arith.mulf %20, %15 : vector<16x32xf32>
      %22 = arith.addf %15, %21 : vector<16x32xf32>
      %cst_16 = arith.constant 0.797884583 : f32
      %23 = vector.broadcast %cst_16 : f32 to vector<16x32xf32>
      %24 = arith.mulf %23, %22 : vector<16x32xf32>
      %25 = math.tanh %24 : vector<16x32xf32>
      %cst_17 = arith.constant 1.000000e+00 : f32
      %26 = vector.broadcast %cst_17 : f32 to vector<16x32xf32>
      %27 = arith.addf %26, %25 : vector<16x32xf32>
      %28 = arith.mulf %17, %27 : vector<16x32xf32>
      %c0_18 = arith.constant 0 : index
      %c0_19 = arith.constant 0 : index
      %29 = vector.load %arg7[%c0_18, %c0_19] : memref<32x32xf32, #tpu.memory_space<vmem>>, vector<32x32xf32>
      %cst_20 = arith.constant dense<0.000000e+00> : vector<16x32xf32>
      %30 = tpu.matmul %28, %29, %cst_20 {dimension_numbers = #tpu.dot_dimension_numbers<[1], [0], [0], [1], [0, 0, 1, 1], [], []>} : vector<16x32xf32>, vector<32x32xf32>, vector<16x32xf32> -> vector<16x32xf32>
      %c0_21 = arith.constant 0 : index
      %c0_22 = arith.constant 0 : index
      %31 = vector.load %arg8[%c0_21, %c0_22] : memref<1x32xf32, #tpu.memory_space<vmem>>, vector<1x32xf32>
      %32 = vector.broadcast %31 : vector<1x32xf32> to vector<16x32xf32>
      %33 = arith.addf %30, %32 : vector<16x32xf32>
      %c0_23 = arith.constant 0 : index
      %c0_24 = arith.constant 0 : index
      %34 = vector.load %arg2[%c0_23, %c0_24] : memref<16x1xi32, #tpu.memory_space<vmem>>, vector<16x1xi32>
      %c0_i32_25 = arith.constant 0 : i32
      %35 = vector.broadcast %c0_i32_25 : i32 to vector<16x1xi32>
      %36 = arith.cmpi ne, %34, %35 : vector<16x1xi32>
      %c0_26 = arith.constant 0 : index
      %c0_27 = arith.constant 0 : index
      %37 = vector.load %arg4[%c0_26, %c0_27] : memref<16x32xf32, #tpu.memory_space<vmem>>, vector<16x32xf32>
      %38 = vector.shape_cast %36 : vector<16x1xi1> to vector<16x1xi1>
      %39 = vector.broadcast %38 : vector<16x1xi1> to vector<16x32xi1>
      %40 = arith.select %39, %37, %33 : vector<16x32xi1>, vector<16x32xf32>
      %c0_28 = arith.constant 0 : index
      %c0_29 = arith.constant 0 : index
      %41 = vector.load %arg9[%c0_28, %c0_29] : memref<16x32xf32, #tpu.memory_space<vmem>>, vector<16x32xf32>
      tpu.vector_store %arg9[%c0_28, %c0_29], %40 {strides = array<i32>} : memref<16x32xf32, #tpu.memory_space<vmem>>, vector<16x32xf32>,
    } else {
    }
    return
  }
  func.func @transform_0(%arg0: i32, %arg1: i32) -> (i32, i32) {
    %c0_i32 = arith.constant 0 : i32
    %c0_i32_0 = arith.constant 0 : i32
    return %arg0, %c0_i32 : i32, i32
  }
  func.func @transform_1(%arg0: i32, %arg1: i32) -> (i32, i32) {
    %c0_i32 = arith.constant 0 : i32
    return %arg0, %arg1 : i32, i32
  }
  func.func @transform_2(%arg0: i32, %arg1: i32) -> (i32, i32) {
    %c0_i32 = arith.constant 0 : i32
    %c0_i32_0 = arith.constant 0 : i32
    %c0_i32_1 = arith.constant 0 : i32
    return %c0_i32, %c0_i32_0 : i32, i32
  }
  func.func @transform_3(%arg0: i32, %arg1: i32) -> (i32, i32) {
    %c0_i32 = arith.constant 0 : i32
    %c0_i32_0 = arith.constant 0 : i32
    return %arg1, %c0_i32 : i32, i32
  }
  func.func @transform_4(%arg0: i32, %arg1: i32) -> (i32, i32) {
    %c0_i32 = arith.constant 0 : i32
    %c0_i32_0 = arith.constant 0 : i32
    %c0_i32_1 = arith.constant 0 : i32
    return %c0_i32, %c0_i32_0 : i32, i32
  }
  func.func @transform_5(%arg0: i32, %arg1: i32) -> (i32, i32) {
    %c0_i32 = arith.constant 0 : i32
    %c0_i32_0 = arith.constant 0 : i32
    %c0_i32_1 = arith.constant 0 : i32
    return %c0_i32, %c0_i32_0 : i32, i32
  }
  func.func @transform_6(%arg0: i32, %arg1: i32) -> (i32, i32) {
    %c0_i32 = arith.constant 0 : i32
    %c0_i32_0 = arith.constant 0 : i32
    %c0_i32_1 = arith.constant 0 : i32
    return %c0_i32, %c0_i32_0 : i32, i32
  }
  func.func @transform_7(%arg0: i32, %arg1: i32) -> (i32, i32) {
    %c0_i32 = arith.constant 0 : i32
    %c0_i32_0 = arith.constant 0 : i32
    return %arg0, %c0_i32 : i32, i32
  }
}

</mosaic_0001>

<llo_original>
// kernel: tpu_custom_call.1
$region0: #{tpu_custom_call.1}
  #allocation0 [shape = 'u32[]', space=smem, size = 0x4, offset = 0x4, fixed_abs, tag = 'smem constant byte address 0x4 - core index']
  #allocation1 [shape = 'u32[144,128]{1,0:T(1,128)}', space=vmem, size = 0x12000, scoped, tag = 'internal scratch']
  #allocation2 [shape = 'f32[16,32]{1,0:T(8,128)}', space=vmem, size = 0x2000, scoped, tag = 'scratch operand']
  %s0 = inlined_call_operand.vmem [shape: s32[16,1], index: 0, kind: input, shape index: {}]
  %s1 = inlined_call_operand.hbm [shape: f32[16,32], index: 1, kind: input, shape index: {}]
  %s2 = inlined_call_operand.hbm [shape: f32[16,32], index: 2, kind: input, shape index: {}]
  %s3 = inlined_call_operand.hbm [shape: f32[32,32], index: 3, kind: input, shape index: {}]
  %s4 = inlined_call_operand.vmem [shape: f32[1,32], index: 4, kind: input, shape index: {}]
  %s5 = inlined_call_operand.vmem [shape: f32[32,32], index: 5, kind: input, shape index: {}]
  %s6 = inlined_call_operand.vmem [shape: f32[1,32], index: 6, kind: input, shape index: {}]
  %s7 = inlined_call_operand.hbm [shape: f32[16,32], index: 7, kind: output, shape index: {}]
  %s8 = sld [smem:[#allocation0]]
  $region58: #{tpu_custom_call.1} parent=0
    _
  %s10 = ssub.s32 1, %s8
  %s11 = scalar_select 0, %s10, %s8
  $region1: #{tpu_custom_call.1} parent=0
    #allocation3 [shape = 'u8[8192]{0}', space=vmem, size = 0x2000, scoped, tag = 'input window, operand 1, single buffered']
    #allocation4 [shape = 's32[1]{0}', space=sflag, size = 0x4, scoped, tag = 'scoped memory for tpu_custom_call.1']
    #allocation5 [shape = 's32[1]{0}', space=sflag, size = 0x4, scoped, tag = 'scoped memory for tpu_custom_call.1']
    #allocation6 [shape = 'u8[8192]{0}', space=vmem, size = 0x2000, scoped, tag = 'input window, operand 2, single buffered']
    #allocation7 [shape = 's32[1]{0}', space=sflag, size = 0x4, scoped, tag = 'scoped memory for tpu_custom_call.1']
    #allocation8 [shape = 'u8[16384]{0}', space=vmem, size = 0x4000, scoped, tag = 'input window, operand 3, single buffered']
    #allocation9 [shape = 'u8[8192]{0}', space=vmem, size = 0x2000, scoped, tag = 'output window, operand 0, single buffered']
    %12 = vsyncpa [#allocation4], 0
    %13 = vsyncpa [#allocation7], 0
    %14 = vsyncpa [#allocation5], 0
    // Predicated region
    $region2: #{tpu_custom_call.1} parent=1 // pred_check
      _
    $region3: #{tpu_custom_call.1} parent=1 // pred_check_branch
      %16 = sbr.rel (0) target = $region5
    $region4: #{tpu_custom_call.1} parent=1 // pred_region
      _
    $region5: #{tpu_custom_call.1} parent=1 // pred_fallthru
      _
    // Predicated region
    $region6: #{tpu_custom_call.1} parent=1 // pred_check
      _
    $region7: #{tpu_custom_call.1} parent=1 // pred_check_branch
      %18 = sbr.rel (0) target = $region9
    $region8: #{tpu_custom_call.1} parent=1 // pred_region
      %s20 = ssub.s32 256, 256
      %21 = vsyncadd [#allocation4], %s20
      %s22 = sshll.u32 [#allocation3], 4
      %s23 = int_to_ptr.vmem [resolvable:$true] %s22
      %28 = dma.hbm_to_vmem [thread:$0]  %s1, 256, %s23, [#allocation4], 128, 128, 8
    $region9: #{tpu_custom_call.1} parent=1 // pred_fallthru
      _
    // Predicated region
    $region10: #{tpu_custom_call.1} parent=1 // pred_check
      _
    $region11: #{tpu_custom_call.1} parent=1 // pred_check_branch
      %30 = sbr.rel (0) target = $region13
    $region12: #{tpu_custom_call.1} parent=1 // pred_region
      %s32 = ssub.s32 256, 256
      %33 = vsyncadd [#allocation7], %s32
      %s34 = sshll.u32 [#allocation6], 4
      %s35 = int_to_ptr.vmem [resolvable:$true] %s34
      %40 = dma.hbm_to_vmem [thread:$0]  %s2, 256, %s35, [#allocation7], 128, 128, 8
    $region13: #{tpu_custom_call.1} parent=1 // pred_fallthru
      _
    // Predicated region
    $region14: #{tpu_custom_call.1} parent=1 // pred_check
      _
    $region15: #{tpu_custom_call.1} parent=1 // pred_check_branch
      %42 = sbr.rel (0) target = $region17
    $region16: #{tpu_custom_call.1} parent=1 // pred_region
      %s44 = ssub.s32 512, 512
      %45 = vsyncadd [#allocation7], %s44
      %s46 = sshll.u32 [#allocation8], 4
      %s47 = int_to_ptr.vmem [resolvable:$true] %s46
      %52 = dma.hbm_to_vmem [thread:$0]  %s3, 512, %s47, [#allocation7], 128, 128, 8
    $region17: #{tpu_custom_call.1} parent=1 // pred_fallthru
      _
    // Predicated region
    $region18: #{tpu_custom_call.1} parent=1 // pred_check
      _
    $region19: #{tpu_custom_call.1} parent=1 // pred_check_branch
      %54 = sbr.rel (0) target = $region21
    $region20: #{tpu_custom_call.1} parent=1 // pred_region
      _
    $region21: #{tpu_custom_call.1} parent=1 // pred_fallthru
      _
    // Predicated region
    $region22: #{tpu_custom_call.1} parent=1 // pred_check
      _
    $region23: #{tpu_custom_call.1} parent=1 // pred_check_branch
      %56 = sbr.rel (0) target = $region25
    $region24: #{tpu_custom_call.1} parent=1 // pred_region
      _
    $region25: #{tpu_custom_call.1} parent=1 // pred_fallthru
      _
    // Predicated region
    $region26: #{tpu_custom_call.1} parent=1 // pred_check
      _
    $region27: #{tpu_custom_call.1} parent=1 // pred_check_branch
      %58 = sbr.rel (0) target = $region29
    $region28: #{tpu_custom_call.1} parent=1 // pred_region
      _
    $region29: #{tpu_custom_call.1} parent=1 // pred_fallthru
      _
    // Predicated region
    $region30: #{tpu_custom_call.1} parent=1 // pred_check
      _
    $region31: #{tpu_custom_call.1} parent=1 // pred_check_branch
      %60 = sbr.rel (0) target = $region33
    $region32: #{tpu_custom_call.1} parent=1 // pred_region
      %61 = dma.done [#allocation4], 256
    $region33: #{tpu_custom_call.1} parent=1 // pred_fallthru
      _
    // Predicated region
    $region34: #{tpu_custom_call.1} parent=1 // pred_check
      _
    $region35: #{tpu_custom_call.1} parent=1 // pred_check_branch
      %63 = sbr.rel (0) target = $region37
    $region36: #{tpu_custom_call.1} parent=1 // pred_region
      %64 = dma.done [#allocation7], 256
    $region37: #{tpu_custom_call.1} parent=1 // pred_fallthru
      _
    // Predicated region
    $region38: #{tpu_custom_call.1} parent=1 // pred_check
      _
    $region39: #{tpu_custom_call.1} parent=1 // pred_check_branch
      %66 = sbr.rel (0) target = $region41
    $region40: #{tpu_custom_call.1} parent=1 // pred_region
      %67 = dma.done [#allocation7], 512
    $region41: #{tpu_custom_call.1} parent=1 // pred_fallthru
      _
    %p68 = scmp.eq.s32.totalorder 0, 0
    // Predicated region
    $region42: #{tpu_custom_call.1} parent=1 // pred_check
      %p69 = pneg %p68
    $region43: #{tpu_custom_call.1} parent=1 // pred_check_branch
      %71 = sbr.rel (%p69) target = $region45
    $region44: #{tpu_custom_call.1} parent=1 // pred_region
      %vm72 = vcmask 261120
      %73 = vst.msk [vmem:[#allocation2] sm:$0xff] %vm72, 0.0
      %74 = vst.msk [vmem:[#allocation2 + $0x8] sm:$0xff] %vm72, 0.0
    $region45: #{tpu_custom_call.1} parent=1 // pred_fallthru
      _
    %v75 = vld [vmem:[#allocation3] sm:$0xff]
    %v76 = vld [vmem:[#allocation3 + $0x8] sm:$0xff]
    %v77 = vld [vmem:[#allocation2] sm:$0xff]
    %v78 = vld [vmem:[#allocation2 + $0x8] sm:$0xff]
    %v79 = vld [vmem:[#allocation8] sm:$0xff]
    %v80 = vld [vmem:[#allocation8 + $0x8] sm:$0xff]
    %v81 = vld [vmem:[#allocation8 + $0x10] sm:$0xff]
    %v82 = vld [vmem:[#allocation8 + $0x18] sm:$0xff]
    %vm83 = vcmask 261120
    %v85 = vsel %vm83, %v75, 0
    %v88 = vsel %vm83, %v76, 0
    %90 = vmatprep.subr.mxu0 0.0
    %91 = vmatpush1.msra.mxu0 %v79
    %92 = vmatprep.subr.mxu0 0.0
    %93 = vmatpush1.msra.mxu0 %v80
    %94 = vmatprep.subr.mxu0 0.0
    %95 = vmatpush1.msra.mxu0 %v81
    %96 = vmatprep.subr.mxu0 0.0
    %97 = vmatpush1.msra.mxu0 %v82
    %98 = vmatprep.subr.mxu0 0.0
    %99 = vmatpush1.msra.mxu0 0.0
    %100 = vmatprep.subr.mxu0 0.0
    %101 = vmatpush1.msra.mxu0 0.0
    %102 = vmatprep.subr.mxu0 0.0
    %103 = vmatpush1.msra.mxu0 0.0
    %104 = vmatprep.subr.mxu0 0.0
    %105 = vmatpush1.msra.mxu0 0.0
    %106 = vmatprep.subr.mxu0 0.0
    %107 = vmatpush1.msra.mxu0 0.0
    %108 = vmatprep.subr.mxu0 0.0
    %109 = vmatpush1.msra.mxu0 0.0
    %110 = vmatprep.subr.mxu0 0.0
    %111 = vmatpush1.msra.mxu0 0.0
    %112 = vmatprep.subr.mxu0 0.0
    %113 = vmatpush1.msra.mxu0 0.0
    %114 = vmatprep.subr.mxu0 0.0
    %115 = vmatpush1.msra.mxu0 0.0
    %116 = vmatprep.subr.mxu0 0.0
    %117 = vmatpush1.msra.mxu0 0.0
    %118 = vmatprep.subr.mxu0 0.0
    %119 = vmatpush1.msra.mxu0 0.0
    %120 = vmatprep.subr.mxu0 0.0
    %121 = vmatpush1.msra.mxu0 0.0
    %122 = vmatprep.subr.mxu0 0.0
    %123 = vmatpush1.msra.mxu0 0.0
    %124 = vmatprep.subr.mxu0 0.0
    %125 = vmatpush1.msra.mxu0 0.0
    %126 = vmatprep.subr.mxu0 0.0
    %127 = vmatpush1.msra.mxu0 0.0
    %128 = vmatprep.subr.mxu0 0.0
    %129 = vmatpush1.msra.mxu0 0.0
    %130 = vmatprep.subr.mxu0 0.0
    %131 = vmatpush1.msra.mxu0 0.0
    %132 = vmatprep.subr.mxu0 0.0
    %133 = vmatpush1.msra.mxu0 0.0
    %134 = vmatprep.subr.mxu0 0.0
    %135 = vmatpush1.msra.mxu0 0.0
    %136 = vmatprep.subr.mxu0 0.0
    %137 = vmatpush1.msra.mxu0 0.0
    %138 = vmatprep.subr.mxu0 0.0
    %139 = vmatpush1.msra.mxu0 0.0
    %140 = vmatprep.subr.mxu0 0.0
    %141 = vmatpush1.msra.mxu0 0.0
    %142 = vmatprep.subr.mxu0 0.0
    %143 = vmatpush1.msra.mxu0 0.0
    %144 = vmatprep.subr.mxu0 0.0
    %145 = vmatpush1.msra.mxu0 0.0
    %146 = vmatprep.subr.mxu0 0.0
    %147 = vmatpush1.msra.mxu0 0.0
    %148 = vmatprep.subr.mxu0 0.0
    %149 = vmatpush1.msra.mxu0 0.0
    %150 = vmatprep.subr.mxu0 0.0
    %151 = vmatpush1.msra.mxu0 0.0
    %152 = vmatprep.subr.mxu0 0.0
    %153 = vmatpush1.msra.mxu0 0.0
    %154 = vmatprep.mubr.f32.mxu0 0.0
    %155 = vmatmul.mubr.f32.gmra.mrb[0].mxu0 %v85
    %v156 = vpop.f32.mrb[0].mxu0
    %v157 = vadd.f32 0.0, %v156
    %v158 = vpop.f32.mrb[0].mxu0
    %159 = vmatprep.mubr.f32.mxu0 0.0
    %160 = vmatmul.mubr.f32.gmra.mrb[0].mxu0 %v88
    %v161 = vpop.f32.mrb[0].mxu0
    %v162 = vadd.f32 0.0, %v161
    %v163 = vpop.f32.mrb[0].mxu0
    %164 = vdwg.mxu0
    %v165 = vadd.f32 %v77, %v157
    %v166 = vadd.f32 %v78, %v162
    %167 = vst.msk [vmem:[#allocation2] sm:$0xff] %vm83, %v165
    %168 = vst.msk [vmem:[#allocation2 + $0x8] sm:$0xff] %vm83, %v166
    // Predicated region
    $region46: #{tpu_custom_call.1} parent=1 // pred_check
      %p169 = pneg %p68
    $region47: #{tpu_custom_call.1} parent=1 // pred_check_branch
      %171 = sbr.rel (%p169) target = $region49
    $region48: #{tpu_custom_call.1} parent=1 // pred_region
      %v172 = vld [vmem:[#allocation2] sm:$0xff]
      %v173 = vld [vmem:[#allocation2 + $0x8] sm:$0xff]
      %v174 = vld [vmem:[%s4] sm:$0x1]
      %v176 = vlaneseq
      %v177 = vshrl.u32 %v176, 7
      %v178 = vsub.s32 0, %v177
      %v179 = vrot.slane %v174, %v178
      %v181 = vadd.f32 %v172, %v179
      %v182 = vadd.f32 %v173, %v179
      %v183 = vmul.f32 %v181, 0.5
      %v184 = vmul.f32 %v182, 0.5
      %v185 = vmul.f32 %v181, 0.044715
      %v186 = vmul.f32 %v182, 0.044715
      %v187 = vmul.f32 %v185, %v181
      %v188 = vmul.f32 %v186, %v182
      %v189 = vmul.f32 %v187, %v181
      %v190 = vmul.f32 %v188, %v182
      %v191 = vadd.f32 %v181, %v189
      %v192 = vadd.f32 %v182, %v190
      %v193 = vmul.f32 %v191, 0.7978846
      %v194 = vmul.f32 %v192, 0.7978846
      %v195 = vtanh.pop %v193
      %v196 = vtanh.pop %v194
      %v197 = vadd.f32 %v195, 1.0
      %v198 = vadd.f32 %v196, 1.0
      %v199 = vmul.f32 %v183, %v197
      %v200 = vmul.f32 %v184, %v198
      %v201 = vld [vmem:[%s5] sm:$0xff]
      %v202 = vld [vmem:[%s5 + $0x8] sm:$0xff]
      %v203 = vld [vmem:[%s5 + $0x10] sm:$0xff]
      %v204 = vld [vmem:[%s5 + $0x18] sm:$0xff]
      %v205 = vld [vmem:[%s6] sm:$0x1]
      %v207 = vlaneseq
      %v208 = vshrl.u32 %v207, 7
      %v209 = vsub.s32 0, %v208
      %v210 = vrot.slane %v205, %v209
      %v213 = vsel %vm83, %v199, 0
      %v216 = vsel %vm83, %v200, 0
      %218 = vmatprep.subr.mxu0 0.0
      %219 = vmatpush1.msra.mxu0 %v201
      %220 = vmatprep.subr.mxu0 0.0
      %221 = vmatpush1.msra.mxu0 %v202
      %222 = vmatprep.subr.mxu0 0.0
      %223 = vmatpush1.msra.mxu0 %v203
      %224 = vmatprep.subr.mxu0 0.0
      %225 = vmatpush1.msra.mxu0 %v204
      %226 = vmatprep.subr.mxu0 0.0
      %227 = vmatpush1.msra.mxu0 0.0
      %228 = vmatprep.subr.mxu0 0.0
      %229 = vmatpush1.msra.mxu0 0.0
      %230 = vmatprep.subr.mxu0 0.0
      %231 = vmatpush1.msra.mxu0 0.0
      %232 = vmatprep.subr.mxu0 0.0
      %233 = vmatpush1.msra.mxu0 0.0
      %234 = vmatprep.subr.mxu0 0.0
      %235 = vmatpush1.msra.mxu0 0.0
      %236 = vmatprep.subr.mxu0 0.0
      %237 = vmatpush1.msra.mxu0 0.0
      %238 = vmatprep.subr.mxu0 0.0
      %239 = vmatpush1.msra.mxu0 0.0
      %240 = vmatprep.subr.mxu0 0.0
      %241 = vmatpush1.msra.mxu0 0.0
      %242 = vmatprep.subr.mxu0 0.0
      %243 = vmatpush1.msra.mxu0 0.0
      %244 = vmatprep.subr.mxu0 0.0
      %245 = vmatpush1.msra.mxu0 0.0
      %246 = vmatprep.subr.mxu0 0.0
      %247 = vmatpush1.msra.mxu0 0.0
      %248 = vmatprep.subr.mxu0 0.0
      %249 = vmatpush1.msra.mxu0 0.0
      %250 = vmatprep.subr.mxu0 0.0
      %251 = vmatpush1.msra.mxu0 0.0
      %252 = vmatprep.subr.mxu0 0.0
      %253 = vmatpush1.msra.mxu0 0.0
      %254 = vmatprep.subr.mxu0 0.0
      %255 = vmatpush1.msra.mxu0 0.0
      %256 = vmatprep.subr.mxu0 0.0
      %257 = vmatpush1.msra.mxu0 0.0
      %258 = vmatprep.subr.mxu0 0.0
      %259 = vmatpush1.msra.mxu0 0.0
      %260 = vmatprep.subr.mxu0 0.0
      %261 = vmatpush1.msra.mxu0 0.0
      %262 = vmatprep.subr.mxu0 0.0
      %263 = vmatpush1.msra.mxu0 0.0
      %264 = vmatprep.subr.mxu0 0.0
      %265 = vmatpush1.msra.mxu0 0.0
      %266 = vmatprep.subr.mxu0 0.0
      %267 = vmatpush1.msra.mxu0 0.0
      %268 = vmatprep.subr.mxu0 0.0
      %269 = vmatpush1.msra.mxu0 0.0
      %270 = vmatprep.subr.mxu0 0.0
      %271 = vmatpush1.msra.mxu0 0.0
      %272 = vmatprep.subr.mxu0 0.0
      %273 = vmatpush1.msra.mxu0 0.0
      %274 = vmatprep.subr.mxu0 0.0
      %275 = vmatpush1.msra.mxu0 0.0
      %276 = vmatprep.subr.mxu0 0.0
      %277 = vmatpush1.msra.mxu0 0.0
      %278 = vmatprep.subr.mxu0 0.0
      %279 = vmatpush1.msra.mxu0 0.0
      %280 = vmatprep.subr.mxu0 0.0
      %281 = vmatpush1.msra.mxu0 0.0
      %282 = vmatprep.mubr.f32.mxu0 0.0
      %283 = vmatmul.mubr.f32.gmra.mrb[0].mxu0 %v213
      %v284 = vpop.f32.mrb[0].mxu0
      %v285 = vadd.f32 %v210, %v284
      %v286 = vpop.f32.mrb[0].mxu0
      %287 = vmatprep.mubr.f32.mxu0 0.0
      %288 = vmatmul.mubr.f32.gmra.mrb[0].mxu0 %v216
      %v289 = vpop.f32.mrb[0].mxu0
      %v290 = vadd.f32 %v210, %v289
      %v291 = vpop.f32.mrb[0].mxu0
      %292 = vdwg.mxu0
      %v293 = vld [vmem:[%s0] sm:$0xff]
      %v294 = vld [vmem:[%s0 + $0x8] sm:$0xff]
      %vm295 = vcmp.ne.s32.totalorder %v293, 0
      %vm296 = vcmp.ne.s32.totalorder %v294, 0
      %v297 = vld [vmem:[#allocation6] sm:$0xff]
      %v298 = vld [vmem:[#allocation6 + $0x8] sm:$0xff]
      %v299 = vsel %vm295, 1, 0
      %v300 = vsel %vm296, 1, 0
      %301 = vset.pattern.permute.xlu0 0
      %302 = vperm.xlu0 %301, %v299
      %v303 = vpop.permute.xlu0 %302
      %304 = vset.pattern.permute.xlu0 0
      %305 = vperm.xlu0 %304, %v300
      %v306 = vpop.permute.xlu0 %305
      %vm307 = vcmp.eq.s32.totalorder %v303, 1
      %vm308 = vcmp.eq.s32.totalorder %v306, 1
      %v309 = vsel %vm307, %v297, %v285
      %v310 = vsel %vm308, %v298, %v290
      %311 = vst.msk [vmem:[#allocation9] sm:$0xff] %vm83, %v309
      %312 = vst.msk [vmem:[#allocation9 + $0x8] sm:$0xff] %vm83, %v310
    $region49: #{tpu_custom_call.1} parent=1 // pred_fallthru
      _
    // Predicated region
    $region50: #{tpu_custom_call.1} parent=1 // pred_check
      _
    $region51: #{tpu_custom_call.1} parent=1 // pred_check_branch
      %314 = sbr.rel (0) target = $region53
    $region52: #{tpu_custom_call.1} parent=1 // pred_region
      %s316 = ssub.s32 256, 256
      %317 = vsyncadd [#allocation5], %s316
      %s318 = sshll.u32 [#allocation9], 4
      %s319 = int_to_ptr.vmem [resolvable:$true] %s318
      %324 = dma.vmem_to_hbm [thread:$0]  %s319, 256, %s7, [#allocation5], 128, 128, 8
    $region53: #{tpu_custom_call.1} parent=1 // pred_fallthru
      _
    // Predicated region
    $region54: #{tpu_custom_call.1} parent=1 // pred_check
      _
    $region55: #{tpu_custom_call.1} parent=1 // pred_check_branch
      %326 = sbr.rel (0) target = $region57
    $region56: #{tpu_custom_call.1} parent=1 // pred_region
      %327 = dma.done [#allocation5], 256
    $region57: #{tpu_custom_call.1} parent=1 // pred_fallthru
      _
    %328 = vsyncpa [#allocation4], 1
    %329 = vsyncpa [#allocation7], 1
    %330 = vsyncpa [#allocation5], 1

</llo_original>
